<compile_context>
chip_gen: v6e
topology: v6e:2x2x1
jax: 0.10.0
libtpu: 0.0.40
codegen_flags: <defaults>
</compile_context>

<pallas_src>
import functools

import jax
import jax.numpy as jnp
from jax.experimental import pallas as pl
from jax.experimental.pallas import tpu as pltpu


def _bias_leaky(z_f32, b_ref, act_dtype):
    # Bias add + LeakyReLU(0.2). mul+max form (1 fewer VALU op than cmp+select);
    # runs in bf16 on v6e/v7x, f32 on v5e.
    z = z_f32.astype(act_dtype) + b_ref[...]
    return jnp.maximum(z, 0.2 * z)


def _mlp_kernel(x_ref,
                w0_ref, b0_ref,
                w1_ref, b1_ref,
                w2_ref, b2_ref,
                w3_ref, b3_ref,
                w4c_ref, b4_ref,
                o_ref, *, act_dtype):
    # x_ref: (bb, 15) f32 -- batch on sublanes, features on lanes (contiguous DMA).
    xb = x_ref[...].astype(jnp.bfloat16)

    # hidden0: 15 -> 256.  NT contraction (feature dim of both operands) gives a
    # feature-major (256, bb) result: batch rides the 128-lane axis from here on.
    z = jax.lax.dot_general(
        w0_ref[...], xb,
        dimension_numbers=(((1,), (1,)), ((), ())),
        preferred_element_type=jnp.float32)
    h = _bias_leaky(z, b0_ref, act_dtype)            # Dropout(0.3): identity (eval)

    # hidden1: 256 -> 128
    z = jnp.dot(w1_ref[...], h.astype(jnp.bfloat16), preferred_element_type=jnp.float32)
    h = _bias_leaky(z, b1_ref, act_dtype)            # Dropout(0.2): identity (eval)

    # hidden2: 128 -> 64
    z = jnp.dot(w2_ref[...], h.astype(jnp.bfloat16), preferred_element_type=jnp.float32)
    h = _bias_leaky(z, b2_ref, act_dtype)            # Dropout(0.2): identity (eval)

    # hidden3: 64 -> 32
    z = jnp.dot(w3_ref[...], h.astype(jnp.bfloat16), preferred_element_type=jnp.float32)
    h = _bias_leaky(z, b3_ref, act_dtype)            # Dropout(0.2): identity (eval)

    # out: 32 -> 1 on VPU (broadcast multiply) + XLU (sublane reduce); keeps the
    # result lane-dense as (1, bb) and avoids an N=1 MXU pass.
    y = jnp.sum(h.astype(jnp.float32) * w4c_ref[...], axis=0, keepdims=True) + b4_ref[...]
    o_ref[...] = y.astype(o_ref.dtype)


@functools.lru_cache(maxsize=1)
def _chip_config():
    kind = ""
    try:
        kind = jax.devices()[0].device_kind.lower()
    except Exception:
        pass
    if "v6" in kind:
        # 128 MiB physical VMEM: larger tiles + a 64 MiB scoped limit are safe.
        return {"max_bb": 8192, "vmem_limit": 64 * 1024 * 1024, "bf16_eltwise": True}
    if "v7" in kind:
        # 64 MiB physical VMEM: keep the 32 MiB scoped cap; bf16 VALU available.
        return {"max_bb": 4096, "vmem_limit": 32 * 1024 * 1024, "bf16_eltwise": True}
    # v5e / unknown: no bf16 VPU (keep f32 elementwise); raise 16 MiB default to 32 MiB.
    return {"max_bb": 4096, "vmem_limit": 32 * 1024 * 1024, "bf16_eltwise": False}


def _pick_bb(B, block_b, max_bb):
    """Batch tile: multiple of 128, >=2 tiles when possible (feeds both v7x TCs)."""
    if block_b is None:
        block_b = max_bb
    block_b = max(128, (int(block_b) // 128) * 128)
    if B <= 128:
        return B                        # single tile; block == full dims is still valid
    half = -(-B // 2)                   # ceil(B/2): at least two parallel grid steps
    bb = -(-half // 128) * 128          # round up to a multiple of 128
    return min(bb, block_b)


@functools.partial(jax.jit, static_argnames=("block_b",))
def discriminator_forward(x, params, block_b=None):
    """x: [B, 15] float32. params: list of (W[out, in], b[out]) pairs (PyTorch layout)."""
    B, F = x.shape
    cfg = _chip_config()
    bb = _pick_bb(B, block_b, cfg["max_bb"])
    grid = (pl.cdiv(B, bb),)
    act_dtype = jnp.bfloat16 if cfg["bf16_eltwise"] else jnp.float32

    # Input stays in its natural (B, 15) f32 layout -> contiguous per-tile DMA;
    # the cast to bf16 and the transpose into feature-major happen in-kernel.
    in_specs = [pl.BlockSpec((bb, F), lambda i: (i, 0))]
    flat = [x]

    # Hidden layers 0..3: bf16 MXU weights, biases as (nout, 1) columns in the
    # elementwise dtype.  These blocks are grid-invariant (fetched once).
    for (w, b) in params[:-1]:
        nout, nin = w.shape
        in_specs.append(pl.BlockSpec((nout, nin), lambda i: (0, 0)))
        in_specs.append(pl.BlockSpec((nout, 1), lambda i: (0, 0)))
        flat.append(w.astype(jnp.bfloat16))
        flat.append(b.reshape(nout, 1).astype(act_dtype))

    # Final layer -> VPU/XLU reduce: weight as an f32 (32, 1) column.
    w4, b4 = params[-1]
    n_out, n_in = w4.shape                           # (1, 32)
    in_specs.append(pl.BlockSpec((n_in, 1), lambda i: (0, 0)))
    in_specs.append(pl.BlockSpec((1, 1), lambda i: (0, 0)))
    flat.append(w4.astype(jnp.float32).T.reshape(n_in, 1))
    flat.append(b4.reshape(1, 1).astype(jnp.float32))

    out_spec = pl.BlockSpec((1, bb), lambda i: (0, i))

    flops = 2 * B * int(sum(w.shape[0] * w.shape[1] for (w, _) in params))
    bytes_accessed = B * (F * 4 + 4) + int(sum(w.size * 2 + b.size * 4 for (w, b) in params))

    out = pl.pallas_call(
        functools.partial(_mlp_kernel, act_dtype=act_dtype),
        out_shape=jax.ShapeDtypeStruct((1, B), jnp.float32),
        grid_spec=pltpu.PrefetchScalarGridSpec(
            num_scalar_prefetch=0,
            grid=grid,
            in_specs=in_specs,
            out_specs=out_spec,
        ),
        compiler_params=pltpu.CompilerParams(
            dimension_semantics=("parallel",),
            vmem_limit_bytes=cfg["vmem_limit"],
        ),
        cost_estimate=pl.CostEstimate(
            flops=flops, transcendentals=0, bytes_accessed=bytes_accessed),
    )(*flat)

    return out.reshape(B, n_out)


def init_params(key):
    """nn.Linear default init (uniform +/- 1/sqrt(fan_in)); W stored PyTorch-style [out, in]."""
    dims = [15, 256, 128, 64, 32, 1]
    params = []
    for i in range(len(dims) - 1):
        fan_in, fan_out = dims[i], dims[i + 1]
        key, kw, kb = jax.random.split(key, 3)
        bound = 1.0 / jnp.sqrt(jnp.float32(fan_in))
        w = jax.random.uniform(kw, (fan_out, fan_in), jnp.float32, -bound, bound)
        b = jax.random.uniform(kb, (fan_out,), jnp.float32, -bound, bound)
        params.append((w, b))
    return params


def reference_forward(x, params):
    h = x
    for idx, (w, b) in enumerate(params):
        h = h @ w.T + b
        if idx < len(params) - 1:
            h = jnp.where(h >= 0, h, 0.2 * h)
    return h


if __name__ == "__main__":
    key = jax.random.PRNGKey(0)
    key, kx = jax.random.split(key)
    params = init_params(key)

    # Case 1: tiny batch -> single tile whose blocks equal the full array dims.
    x1 = jax.random.normal(kx, (4, 15), jnp.float32)
    out1 = jax.block_until_ready(discriminator_forward(x1, params))
    ref1 = reference_forward(x1, params)
    assert out1.shape == (4, 1), out1.shape
    assert jnp.allclose(out1, ref1, atol=5e-2, rtol=5e-2), (
        float(jnp.max(jnp.abs(out1 - ref1))))

    # Case 2: ragged multi-tile grid (B not a multiple of the tile) -> exercises
    # the padded-read / masked-write path.
    x2 = jax.random.normal(jax.random.PRNGKey(1), (300, 15), jnp.float32)
    out2 = jax.block_until_ready(discriminator_forward(x2, params, block_b=128))
    ref2 = reference_forward(x2, params)
    assert out2.shape == (300, 1), out2.shape
    assert jnp.allclose(out2, ref2, atol=5e-2, rtol=5e-2), (
        float(jnp.max(jnp.abs(out2 - ref2))))

    # Case 3: default tiling -> at least two "parallel" tiles (both v7x cores fed).
    x3 = jax.random.normal(jax.random.PRNGKey(2), (512, 15), jnp.float32)
    out3 = jax.block_until_ready(discriminator_forward(x3, params))
    ref3 = reference_forward(x3, params)
    assert out3.shape == (512, 1), out3.shape
    assert jnp.allclose(out3, ref3, atol=5e-2, rtol=5e-2), (
        float(jnp.max(jnp.abs(out3 - ref3))))

    print("KERNEL_OK")
</pallas_src>

<mosaic_0001>
module attributes {stable_mosaic.version = 11 : i64} {
  func.func @_mlp_kernel(%arg0: i32, %arg1: memref<4x15xf32, #tpu.memory_space<vmem>>, %arg2: memref<256x15xbf16, #tpu.memory_space<vmem>>, %arg3: memref<256x1xf32, #tpu.memory_space<vmem>>, %arg4: memref<128x256xbf16, #tpu.memory_space<vmem>>, %arg5: memref<128x1xf32, #tpu.memory_space<vmem>>, %arg6: memref<64x128xbf16, #tpu.memory_space<vmem>>, %arg7: memref<64x1xf32, #tpu.memory_space<vmem>>, %arg8: memref<32x64xbf16, #tpu.memory_space<vmem>>, %arg9: memref<32x1xf32, #tpu.memory_space<vmem>>, %arg10: memref<32x1xf32, #tpu.memory_space<vmem>>, %arg11: memref<1x1xf32, #tpu.memory_space<vmem>>, %arg12: memref<1x4xf32, #tpu.memory_space<vmem>>) attributes {dimension_semantics = [#tpu.dimension_semantics<parallel>], iteration_bounds = array<i64: 1>, scalar_prefetch = 0 : i64, scratch_operands = 0 : i64, tpu.core_type = #tpu.core_type<tc>, window_params = [{transform_indices = @transform_0, window_bounds = array<i64: 4, 15>}, {pipeline_mode = #tpu.pipeline_mode<synchronous>, transform_indices = @transform_1, window_bounds = array<i64: 256, 15>}, {pipeline_mode = #tpu.pipeline_mode<synchronous>, transform_indices = @transform_2, window_bounds = array<i64: 256, 1>}, {pipeline_mode = #tpu.pipeline_mode<synchronous>, transform_indices = @transform_3, window_bounds = array<i64: 128, 256>}, {pipeline_mode = #tpu.pipeline_mode<synchronous>, transform_indices = @transform_4, window_bounds = array<i64: 128, 1>}, {pipeline_mode = #tpu.pipeline_mode<synchronous>, transform_indices = @transform_5, window_bounds = array<i64: 64, 128>}, {pipeline_mode = #tpu.pipeline_mode<synchronous>, transform_indices = @transform_6, window_bounds = array<i64: 64, 1>}, {pipeline_mode = #tpu.pipeline_mode<synchronous>, transform_indices = @transform_7, window_bounds = array<i64: 32, 64>}, {pipeline_mode = #tpu.pipeline_mode<synchronous>, transform_indices = @transform_8, window_bounds = array<i64: 32, 1>}, {pipeline_mode = #tpu.pipeline_mode<synchronous>, transform_indices = @transform_9, window_bounds = array<i64: 32, 1>}, {pipeline_mode = #tpu.pipeline_mode<synchronous>, transform_indices = @transform_10, window_bounds = array<i64: 1, 1>}, {transform_indices = @transform_11, window_bounds = array<i64: 1, 4>}]} {
    %c0 = arith.constant 0 : index
    %c0_0 = arith.constant 0 : index
    %0 = vector.load %arg1[%c0, %c0_0] : memref<4x15xf32, #tpu.memory_space<vmem>>, vector<4x15xf32>
    %1 = arith.truncf %0 : vector<4x15xf32> to vector<4x15xbf16>
    %c0_1 = arith.constant 0 : index
    %c0_2 = arith.constant 0 : index
    %2 = vector.load %arg2[%c0_1, %c0_2] : memref<256x15xbf16, #tpu.memory_space<vmem>>, vector<256x15xbf16>
    %cst = arith.constant dense<0.000000e+00> : vector<256x4xf32>
    %3 = tpu.matmul %2, %1, %cst {dimension_numbers = #tpu.dot_dimension_numbers<[1], [1], [0], [0], [0, 0, 1, 0], [], []>} : vector<256x15xbf16>, vector<4x15xbf16>, vector<256x4xf32> -> vector<256x4xf32>
    %c0_3 = arith.constant 0 : index
    %c0_4 = arith.constant 0 : index
    %4 = vector.load %arg3[%c0_3, %c0_4] : memref<256x1xf32, #tpu.memory_space<vmem>>, vector<256x1xf32>
    %5 = vector.broadcast %4 : vector<256x1xf32> to vector<256x4xf32>
    %6 = arith.addf %3, %5 : vector<256x4xf32>
    %cst_5 = arith.constant 2.000000e-01 : f32
    %7 = vector.broadcast %cst_5 : f32 to vector<256x4xf32>
    %8 = arith.mulf %7, %6 : vector<256x4xf32>
    %9 = arith.maximumf %6, %8 : vector<256x4xf32>
    %c0_6 = arith.constant 0 : index
    %c0_7 = arith.constant 0 : index
    %10 = vector.load %arg4[%c0_6, %c0_7] : memref<128x256xbf16, #tpu.memory_space<vmem>>, vector<128x256xbf16>
    %11 = arith.truncf %9 : vector<256x4xf32> to vector<256x4xbf16>
    %cst_8 = arith.constant dense<0.000000e+00> : vector<128x4xf32>
    %12 = tpu.matmul %10, %11, %cst_8 {dimension_numbers = #tpu.dot_dimension_numbers<[1], [0], [0], [1], [0, 0, 1, 1], [], []>} : vector<128x256xbf16>, vector<256x4xbf16>, vector<128x4xf32> -> vector<128x4xf32>
    %c0_9 = arith.constant 0 : index
    %c0_10 = arith.constant 0 : index
    %13 = vector.load %arg5[%c0_9, %c0_10] : memref<128x1xf32, #tpu.memory_space<vmem>>, vector<128x1xf32>
    %14 = vector.broadcast %13 : vector<128x1xf32> to vector<128x4xf32>
    %15 = arith.addf %12, %14 : vector<128x4xf32>
    %cst_11 = arith.constant 2.000000e-01 : f32
    %16 = vector.broadcast %cst_11 : f32 to vector<128x4xf32>
    %17 = arith.mulf %16, %15 : vector<128x4xf32>
    %18 = arith.maximumf %15, %17 : vector<128x4xf32>
    %c0_12 = arith.constant 0 : index
    %c0_13 = arith.constant 0 : index
    %19 = vector.load %arg6[%c0_12, %c0_13] : memref<64x128xbf16, #tpu.memory_space<vmem>>, vector<64x128xbf16>
    %20 = arith.truncf %18 : vector<128x4xf32> to vector<128x4xbf16>
    %cst_14 = arith.constant dense<0.000000e+00> : vector<64x4xf32>
    %21 = tpu.matmul %19, %20, %cst_14 {dimension_numbers = #tpu.dot_dimension_numbers<[1], [0], [0], [1], [0, 0, 1, 1], [], []>} : vector<64x128xbf16>, vector<128x4xbf16>, vector<64x4xf32> -> vector<64x4xf32>
    %c0_15 = arith.constant 0 : index
    %c0_16 = arith.constant 0 : index
    %22 = vector.load %arg7[%c0_15, %c0_16] : memref<64x1xf32, #tpu.memory_space<vmem>>, vector<64x1xf32>
    %23 = vector.broadcast %22 : vector<64x1xf32> to vector<64x4xf32>
    %24 = arith.addf %21, %23 : vector<64x4xf32>
    %cst_17 = arith.constant 2.000000e-01 : f32
    %25 = vector.broadcast %cst_17 : f32 to vector<64x4xf32>
    %26 = arith.mulf %25, %24 : vector<64x4xf32>
    %27 = arith.maximumf %24, %26 : vector<64x4xf32>
    %c0_18 = arith.constant 0 : index
    %c0_19 = arith.constant 0 : index
    %28 = vector.load %arg8[%c0_18, %c0_19] : memref<32x64xbf16, #tpu.memory_space<vmem>>, vector<32x64xbf16>
    %29 = arith.truncf %27 : vector<64x4xf32> to vector<64x4xbf16>
    %cst_20 = arith.constant dense<0.000000e+00> : vector<32x4xf32>
    %30 = tpu.matmul %28, %29, %cst_20 {dimension_numbers = #tpu.dot_dimension_numbers<[1], [0], [0], [1], [0, 0, 1, 1], [], []>} : vector<32x64xbf16>, vector<64x4xbf16>, vector<32x4xf32> -> vector<32x4xf32>
    %c0_21 = arith.constant 0 : index
    %c0_22 = arith.constant 0 : index
    %31 = vector.load %arg9[%c0_21, %c0_22] : memref<32x1xf32, #tpu.memory_space<vmem>>, vector<32x1xf32>
    %32 = vector.broadcast %31 : vector<32x1xf32> to vector<32x4xf32>
    %33 = arith.addf %30, %32 : vector<32x4xf32>
    %cst_23 = arith.constant 2.000000e-01 : f32
    %34 = vector.broadcast %cst_23 : f32 to vector<32x4xf32>
    %35 = arith.mulf %34, %33 : vector<32x4xf32>
    %36 = arith.maximumf %33, %35 : vector<32x4xf32>
    %c0_24 = arith.constant 0 : index
    %c0_25 = arith.constant 0 : index
    %37 = vector.load %arg10[%c0_24, %c0_25] : memref<32x1xf32, #tpu.memory_space<vmem>>, vector<32x1xf32>
    %38 = vector.broadcast %37 : vector<32x1xf32> to vector<32x4xf32>
    %39 = arith.mulf %36, %38 : vector<32x4xf32>
    %cst_26 = arith.constant dense<0.000000e+00> : vector<4xf32>
    %40 = vector.multi_reduction <add>, %39, %cst_26 [0] : vector<32x4xf32> to vector<4xf32>
    %41 = vector.shape_cast %40 : vector<4xf32> to vector<1x4xf32>
    %c0_27 = arith.constant 0 : index
    %c0_28 = arith.constant 0 : index
    %42 = vector.load %arg11[%c0_27, %c0_28] : memref<1x1xf32, #tpu.memory_space<vmem>>, vector<1x1xf32>
    %43 = vector.broadcast %42 : vector<1x1xf32> to vector<1x4xf32>
    %44 = arith.addf %41, %43 : vector<1x4xf32>
    %c0_29 = arith.constant 0 : index
    %c0_30 = arith.constant 0 : index
    %45 = vector.load %arg12[%c0_29, %c0_30] : memref<1x4xf32, #tpu.memory_space<vmem>>, vector<1x4xf32>
    tpu.vector_store %arg12[%c0_29, %c0_30], %44 {strides = array<i32>} : memref<1x4xf32, #tpu.memory_space<vmem>>, vector<1x4xf32>,
    return
  }
  func.func @transform_0(%arg0: i32) -> (i32, i32) {
    %c0_i32 = arith.constant 0 : i32
    %c0_i32_0 = arith.constant 0 : i32
    return %arg0, %c0_i32 : i32, i32
  }
  func.func @transform_1(%arg0: i32) -> (i32, i32) {
    %c0_i32 = arith.constant 0 : i32
    %c0_i32_0 = arith.constant 0 : i32
    %c0_i32_1 = arith.constant 0 : i32
    return %c0_i32, %c0_i32_0 : i32, i32
  }
  func.func @transform_2(%arg0: i32) -> (i32, i32) {
    %c0_i32 = arith.constant 0 : i32
    %c0_i32_0 = arith.constant 0 : i32
    %c0_i32_1 = arith.constant 0 : i32
    return %c0_i32, %c0_i32_0 : i32, i32
  }
  func.func @transform_3(%arg0: i32) -> (i32, i32) {
    %c0_i32 = arith.constant 0 : i32
    %c0_i32_0 = arith.constant 0 : i32
    %c0_i32_1 = arith.constant 0 : i32
    return %c0_i32, %c0_i32_0 : i32, i32
  }
  func.func @transform_4(%arg0: i32) -> (i32, i32) {
    %c0_i32 = arith.constant 0 : i32
    %c0_i32_0 = arith.constant 0 : i32
    %c0_i32_1 = arith.constant 0 : i32
    return %c0_i32, %c0_i32_0 : i32, i32
  }
  func.func @transform_5(%arg0: i32) -> (i32, i32) {
    %c0_i32 = arith.constant 0 : i32
    %c0_i32_0 = arith.constant 0 : i32
    %c0_i32_1 = arith.constant 0 : i32
    return %c0_i32, %c0_i32_0 : i32, i32
  }
  func.func @transform_6(%arg0: i32) -> (i32, i32) {
    %c0_i32 = arith.constant 0 : i32
    %c0_i32_0 = arith.constant 0 : i32
    %c0_i32_1 = arith.constant 0 : i32
    return %c0_i32, %c0_i32_0 : i32, i32
  }
  func.func @transform_7(%arg0: i32) -> (i32, i32) {
    %c0_i32 = arith.constant 0 : i32
    %c0_i32_0 = arith.constant 0 : i32
    %c0_i32_1 = arith.constant 0 : i32
    return %c0_i32, %c0_i32_0 : i32, i32
  }
  func.func @transform_8(%arg0: i32) -> (i32, i32) {
    %c0_i32 = arith.constant 0 : i32
    %c0_i32_0 = arith.constant 0 : i32
    %c0_i32_1 = arith.constant 0 : i32
    return %c0_i32, %c0_i32_0 : i32, i32
  }
  func.func @transform_9(%arg0: i32) -> (i32, i32) {
    %c0_i32 = arith.constant 0 : i32
    %c0_i32_0 = arith.constant 0 : i32
    %c0_i32_1 = arith.constant 0 : i32
    return %c0_i32, %c0_i32_0 : i32, i32
  }
  func.func @transform_10(%arg0: i32) -> (i32, i32) {
    %c0_i32 = arith.constant 0 : i32
    %c0_i32_0 = arith.constant 0 : i32
    %c0_i32_1 = arith.constant 0 : i32
    return %c0_i32, %c0_i32_0 : i32, i32
  }
  func.func @transform_11(%arg0: i32) -> (i32, i32) {
    %c0_i32 = arith.constant 0 : i32
    %c0_i32_0 = arith.constant 0 : i32
    return %c0_i32, %arg0 : i32, i32
  }
}

</mosaic_0001>

<llo_original>
// kernel: discriminator_forward.1
$region0: #{discriminator_forward.1}
  #allocation0 [shape = 'u32[]', space=smem, size = 0x4, offset = 0x4, fixed_abs, tag = 'smem constant byte address 0x4 - core index']
  #allocation1 [shape = 'u32[144,128]{1,0:T(1,128)}', space=vmem, size = 0x12000, scoped, tag = 'internal scratch']
  #allocation2 [shape = 'f32[1,1]{1,0:T(1,128)S(1)}', space=vmem, size = 0x200, scoped, tag = 'scoped memory for discriminator_forward.1']
  %s0 = inlined_call_operand.vmem [shape: f32[4,15], index: 0, kind: input, shape index: {}]
  %s1 = inlined_call_operand.vmem [shape: bf16[256,15], index: 1, kind: input, shape index: {}]
  %s2 = inlined_call_operand.vmem [shape: f32[256,1], index: 2, kind: input, shape index: {}]
  %s3 = inlined_call_operand.vmem [shape: bf16[128,256], index: 3, kind: input, shape index: {}]
  %s4 = inlined_call_operand.vmem [shape: f32[128,1], index: 4, kind: input, shape index: {}]
  %s5 = inlined_call_operand.vmem [shape: bf16[64,128], index: 5, kind: input, shape index: {}]
  %s6 = inlined_call_operand.vmem [shape: f32[64,1], index: 6, kind: input, shape index: {}]
  %s7 = inlined_call_operand.vmem [shape: bf16[32,64], index: 7, kind: input, shape index: {}]
  %s8 = inlined_call_operand.vmem [shape: f32[32,1], index: 8, kind: input, shape index: {}]
  %s9 = inlined_call_operand.vmem [shape: f32[32,1], index: 9, kind: input, shape index: {}]
  %s10 = inlined_call_operand.<no memory space> [shape: f32[1,1], index: 10, kind: input, shape index: {}]
  %s11 = inlined_call_operand.hbm [shape: f32[1,4], index: 11, kind: output, shape index: {}]
  %s12 = sld [smem:[#allocation0]]
  $region54: #{discriminator_forward.1} parent=0
    _
  %s14 = ssub.s32 1, %s12
  %s15 = scalar_select 0, %s14, %s12
  %v16 = vstv %s10
  %17 = vst [vmem:[#allocation2] sm:$0x1] %v16
  $region1: #{discriminator_forward.1} parent=0
    #allocation3 [shape = 'u8[512]{0}', space=vmem, size = 0x400, scoped, tag = 'output window, operand 0, single buffered']
    #allocation4 [shape = 's32[1]{0}', space=sflag, size = 0x4, scoped, tag = 'scoped memory for discriminator_forward.1']
    %18 = vsyncpa [#allocation4], 0
    // Predicated region
    $region2: #{discriminator_forward.1} parent=1 // pred_check
      _
    $region3: #{discriminator_forward.1} parent=1 // pred_check_branch
      %20 = sbr.rel (0) target = $region5
    $region4: #{discriminator_forward.1} parent=1 // pred_region
      _
    $region5: #{discriminator_forward.1} parent=1 // pred_fallthru
      _
    // Predicated region
    $region6: #{discriminator_forward.1} parent=1 // pred_check
      _
    $region7: #{discriminator_forward.1} parent=1 // pred_check_branch
      %22 = sbr.rel (0) target = $region9
    $region8: #{discriminator_forward.1} parent=1 // pred_region
      _
    $region9: #{discriminator_forward.1} parent=1 // pred_fallthru
      _
    // Predicated region
    $region10: #{discriminator_forward.1} parent=1 // pred_check
      _
    $region11: #{discriminator_forward.1} parent=1 // pred_check_branch
      %24 = sbr.rel (0) target = $region13
    $region12: #{discriminator_forward.1} parent=1 // pred_region
      _
    $region13: #{discriminator_forward.1} parent=1 // pred_fallthru
      _
    // Predicated region
    $region14: #{discriminator_forward.1} parent=1 // pred_check
      _
    $region15: #{discriminator_forward.1} parent=1 // pred_check_branch
      %26 = sbr.rel (0) target = $region17
    $region16: #{discriminator_forward.1} parent=1 // pred_region
      _
    $region17: #{discriminator_forward.1} parent=1 // pred_fallthru
      _
    // Predicated region
    $region18: #{discriminator_forward.1} parent=1 // pred_check
      _
    $region19: #{discriminator_forward.1} parent=1 // pred_check_branch
      %28 = sbr.rel (0) target = $region21
    $region20: #{discriminator_forward.1} parent=1 // pred_region
      _
    $region21: #{discriminator_forward.1} parent=1 // pred_fallthru
      _
    // Predicated region
    $region22: #{discriminator_forward.1} parent=1 // pred_check
      _
    $region23: #{discriminator_forward.1} parent=1 // pred_check_branch
      %30 = sbr.rel (0) target = $region25
    $region24: #{discriminator_forward.1} parent=1 // pred_region
      _
    $region25: #{discriminator_forward.1} parent=1 // pred_fallthru
      _
    // Predicated region
    $region26: #{discriminator_forward.1} parent=1 // pred_check
      _
    $region27: #{discriminator_forward.1} parent=1 // pred_check_branch
      %32 = sbr.rel (0) target = $region29
    $region28: #{discriminator_forward.1} parent=1 // pred_region
      _
    $region29: #{discriminator_forward.1} parent=1 // pred_fallthru
      _
    // Predicated region
    $region30: #{discriminator_forward.1} parent=1 // pred_check
      _
    $region31: #{discriminator_forward.1} parent=1 // pred_check_branch
      %34 = sbr.rel (0) target = $region33
    $region32: #{discriminator_forward.1} parent=1 // pred_region
      _
    $region33: #{discriminator_forward.1} parent=1 // pred_fallthru
      _
    // Predicated region
    $region34: #{discriminator_forward.1} parent=1 // pred_check
      _
    $region35: #{discriminator_forward.1} parent=1 // pred_check_branch
      %36 = sbr.rel (0) target = $region37
    $region36: #{discriminator_forward.1} parent=1 // pred_region
      _
    $region37: #{discriminator_forward.1} parent=1 // pred_fallthru
      _
    // Predicated region
    $region38: #{discriminator_forward.1} parent=1 // pred_check
      _
    $region39: #{discriminator_forward.1} parent=1 // pred_check_branch
      %38 = sbr.rel (0) target = $region41
    $region40: #{discriminator_forward.1} parent=1 // pred_region
      _
    $region41: #{discriminator_forward.1} parent=1 // pred_fallthru
      _
    // Predicated region
    $region42: #{discriminator_forward.1} parent=1 // pred_check
      _
    $region43: #{discriminator_forward.1} parent=1 // pred_check_branch
      %40 = sbr.rel (0) target = $region45
    $region44: #{discriminator_forward.1} parent=1 // pred_region
      _
    $region45: #{discriminator_forward.1} parent=1 // pred_fallthru
      _
    %v42 = vld [vmem:[%s0] sm:$0xf]
    %v43 = vpack.c.bf16 %v42, %v42
    %v44 = vld [vmem:[%s1] sm:$0xf]
    %v45 = vld [vmem:[%s1 + $0x4] sm:$0xf]
    %v46 = vld [vmem:[%s1 + $0x8] sm:$0xf]
    %v47 = vld [vmem:[%s1 + $0xc] sm:$0xf]
    %v48 = vld [vmem:[%s1 + $0x10] sm:$0xf]
    %v49 = vld [vmem:[%s1 + $0x14] sm:$0xf]
    %v50 = vld [vmem:[%s1 + $0x18] sm:$0xf]
    %v51 = vld [vmem:[%s1 + $0x1c] sm:$0xf]
    %v52 = vld [vmem:[%s1 + $0x20] sm:$0xf]
    %v53 = vld [vmem:[%s1 + $0x24] sm:$0xf]
    %v54 = vld [vmem:[%s1 + $0x28] sm:$0xf]
    %v55 = vld [vmem:[%s1 + $0x2c] sm:$0xf]
    %v56 = vld [vmem:[%s1 + $0x30] sm:$0xf]
    %v57 = vld [vmem:[%s1 + $0x34] sm:$0xf]
    %v58 = vld [vmem:[%s1 + $0x38] sm:$0xf]
    %v59 = vld [vmem:[%s1 + $0x3c] sm:$0xf]
    %v60 = vld [vmem:[%s1 + $0x40] sm:$0xf]
    %v61 = vld [vmem:[%s1 + $0x44] sm:$0xf]
    %v62 = vld [vmem:[%s1 + $0x48] sm:$0xf]
    %v63 = vld [vmem:[%s1 + $0x4c] sm:$0xf]
    %v64 = vld [vmem:[%s1 + $0x50] sm:$0xf]
    %v65 = vld [vmem:[%s1 + $0x54] sm:$0xf]
    %v66 = vld [vmem:[%s1 + $0x58] sm:$0xf]
    %v67 = vld [vmem:[%s1 + $0x5c] sm:$0xf]
    %v68 = vld [vmem:[%s1 + $0x60] sm:$0xf]
    %v69 = vld [vmem:[%s1 + $0x64] sm:$0xf]
    %v70 = vld [vmem:[%s1 + $0x68] sm:$0xf]
    %v71 = vld [vmem:[%s1 + $0x6c] sm:$0xf]
    %v72 = vld [vmem:[%s1 + $0x70] sm:$0xf]
    %v73 = vld [vmem:[%s1 + $0x74] sm:$0xf]
    %v74 = vld [vmem:[%s1 + $0x78] sm:$0xf]
    %v75 = vld [vmem:[%s1 + $0x7c] sm:$0xf]
    %v76 = vld [vmem:[%s2] sm:$0xff]
    %v77 = vld [vmem:[%s2 + $0x8] sm:$0xff]
    %v78 = vld [vmem:[%s2 + $0x10] sm:$0xff]
    %v79 = vld [vmem:[%s2 + $0x18] sm:$0xff]
    %v80 = vld [vmem:[%s2 + $0x20] sm:$0xff]
    %v81 = vld [vmem:[%s2 + $0x28] sm:$0xff]
    %v82 = vld [vmem:[%s2 + $0x30] sm:$0xff]
    %v83 = vld [vmem:[%s2 + $0x38] sm:$0xff]
    %v84 = vld [vmem:[%s2 + $0x40] sm:$0xff]
    %v85 = vld [vmem:[%s2 + $0x48] sm:$0xff]
    %v86 = vld [vmem:[%s2 + $0x50] sm:$0xff]
    %v87 = vld [vmem:[%s2 + $0x58] sm:$0xff]
    %v88 = vld [vmem:[%s2 + $0x60] sm:$0xff]
    %v89 = vld [vmem:[%s2 + $0x68] sm:$0xff]
    %v90 = vld [vmem:[%s2 + $0x70] sm:$0xff]
    %v91 = vld [vmem:[%s2 + $0x78] sm:$0xff]
    %v92 = vld [vmem:[%s2 + $0x80] sm:$0xff]
    %v93 = vld [vmem:[%s2 + $0x88] sm:$0xff]
    %v94 = vld [vmem:[%s2 + $0x90] sm:$0xff]
    %v95 = vld [vmem:[%s2 + $0x98] sm:$0xff]
    %v96 = vld [vmem:[%s2 + $0xa0] sm:$0xff]
    %v97 = vld [vmem:[%s2 + $0xa8] sm:$0xff]
    %v98 = vld [vmem:[%s2 + $0xb0] sm:$0xff]
    %v99 = vld [vmem:[%s2 + $0xb8] sm:$0xff]
    %v100 = vld [vmem:[%s2 + $0xc0] sm:$0xff]
    %v101 = vld [vmem:[%s2 + $0xc8] sm:$0xff]
    %v102 = vld [vmem:[%s2 + $0xd0] sm:$0xff]
    %v103 = vld [vmem:[%s2 + $0xd8] sm:$0xff]
    %v104 = vld [vmem:[%s2 + $0xe0] sm:$0xff]
    %v105 = vld [vmem:[%s2 + $0xe8] sm:$0xff]
    %v106 = vld [vmem:[%s2 + $0xf0] sm:$0xff]
    %v107 = vld [vmem:[%s2 + $0xf8] sm:$0xff]
    %109 = vset.pattern.permute.xlu0 0
    %110 = vperm.xlu0 %109, %v76
    %v111 = vpop.permute.xlu0 %110
    %114 = vset.pattern.permute.xlu0 0
    %115 = vperm.xlu0 %114, %v77
    %v116 = vpop.permute.xlu0 %115
    %119 = vset.pattern.permute.xlu0 0
    %120 = vperm.xlu0 %119, %v78
    %v121 = vpop.permute.xlu0 %120
    %124 = vset.pattern.permute.xlu0 0
    %125 = vperm.xlu0 %124, %v79
    %v126 = vpop.permute.xlu0 %125
    %129 = vset.pattern.permute.xlu0 0
    %130 = vperm.xlu0 %129, %v80
    %v131 = vpop.permute.xlu0 %130
    %134 = vset.pattern.permute.xlu0 0
    %135 = vperm.xlu0 %134, %v81
    %v136 = vpop.permute.xlu0 %135
    %139 = vset.pattern.permute.xlu0 0
    %140 = vperm.xlu0 %139, %v82
    %v141 = vpop.permute.xlu0 %140
    %144 = vset.pattern.permute.xlu0 0
    %145 = vperm.xlu0 %144, %v83
    %v146 = vpop.permute.xlu0 %145
    %149 = vset.pattern.permute.xlu0 0
    %150 = vperm.xlu0 %149, %v84
    %v151 = vpop.permute.xlu0 %150
    %154 = vset.pattern.permute.xlu0 0
    %155 = vperm.xlu0 %154, %v85
    %v156 = vpop.permute.xlu0 %155
    %159 = vset.pattern.permute.xlu0 0
    %160 = vperm.xlu0 %159, %v86
    %v161 = vpop.permute.xlu0 %160
    %164 = vset.pattern.permute.xlu0 0
    %165 = vperm.xlu0 %164, %v87
    %v166 = vpop.permute.xlu0 %165
    %169 = vset.pattern.permute.xlu0 0
    %170 = vperm.xlu0 %169, %v88
    %v171 = vpop.permute.xlu0 %170
    %174 = vset.pattern.permute.xlu0 0
    %175 = vperm.xlu0 %174, %v89
    %v176 = vpop.permute.xlu0 %175
    %179 = vset.pattern.permute.xlu0 0
    %180 = vperm.xlu0 %179, %v90
    %v181 = vpop.permute.xlu0 %180
    %184 = vset.pattern.permute.xlu0 0
    %185 = vperm.xlu0 %184, %v91
    %v186 = vpop.permute.xlu0 %185
    %189 = vset.pattern.permute.xlu0 0
    %190 = vperm.xlu0 %189, %v92
    %v191 = vpop.permute.xlu0 %190
    %194 = vset.pattern.permute.xlu0 0
    %195 = vperm.xlu0 %194, %v93
    %v196 = vpop.permute.xlu0 %195
    %199 = vset.pattern.permute.xlu0 0
    %200 = vperm.xlu0 %199, %v94
    %v201 = vpop.permute.xlu0 %200
    %204 = vset.pattern.permute.xlu0 0
    %205 = vperm.xlu0 %204, %v95
    %v206 = vpop.permute.xlu0 %205
    %209 = vset.pattern.permute.xlu0 0
    %210 = vperm.xlu0 %209, %v96
    %v211 = vpop.permute.xlu0 %210
    %214 = vset.pattern.permute.xlu0 0
    %215 = vperm.xlu0 %214, %v97
    %v216 = vpop.permute.xlu0 %215
    %219 = vset.pattern.permute.xlu0 0
    %220 = vperm.xlu0 %219, %v98
    %v221 = vpop.permute.xlu0 %220
    %224 = vset.pattern.permute.xlu0 0
    %225 = vperm.xlu0 %224, %v99
    %v226 = vpop.permute.xlu0 %225
    %229 = vset.pattern.permute.xlu0 0
    %230 = vperm.xlu0 %229, %v100
    %v231 = vpop.permute.xlu0 %230
    %234 = vset.pattern.permute.xlu0 0
    %235 = vperm.xlu0 %234, %v101
    %v236 = vpop.permute.xlu0 %235
    %239 = vset.pattern.permute.xlu0 0
    %240 = vperm.xlu0 %239, %v102
    %v241 = vpop.permute.xlu0 %240
    %244 = vset.pattern.permute.xlu0 0
    %245 = vperm.xlu0 %244, %v103
    %v246 = vpop.permute.xlu0 %245
    %249 = vset.pattern.permute.xlu0 0
    %250 = vperm.xlu0 %249, %v104
    %v251 = vpop.permute.xlu0 %250
    %254 = vset.pattern.permute.xlu0 0
    %255 = vperm.xlu0 %254, %v105
    %v256 = vpop.permute.xlu0 %255
    %259 = vset.pattern.permute.xlu0 0
    %260 = vperm.xlu0 %259, %v106
    %v261 = vpop.permute.xlu0 %260
    %264 = vset.pattern.permute.xlu0 0
    %265 = vperm.xlu0 %264, %v107
    %v266 = vpop.permute.xlu0 %265
    %v300 = vunpack.c.l.b16 %v44
    %v301 = vunpack.c.l.b16 %v45
    %v302 = vunpack.c.l.b16 %v46
    %v303 = vunpack.c.l.b16 %v47
    %v304 = vunpack.c.l.b16 %v48
    %v305 = vunpack.c.l.b16 %v49
    %v306 = vunpack.c.l.b16 %v50
    %v307 = vunpack.c.l.b16 %v51
    %v308 = vunpack.c.l.b16 %v52
    %v309 = vunpack.c.l.b16 %v53
    %v310 = vunpack.c.l.b16 %v54
    %v311 = vunpack.c.l.b16 %v55
    %v312 = vunpack.c.l.b16 %v56
    %v313 = vunpack.c.l.b16 %v57
    %v314 = vunpack.c.l.b16 %v58
    %v315 = vunpack.c.l.b16 %v59
    %v316 = vunpack.c.l.b16 %v60
    %v317 = vunpack.c.l.b16 %v61
    %v318 = vunpack.c.l.b16 %v62
    %v319 = vunpack.c.l.b16 %v63
    %v320 = vunpack.c.l.b16 %v64
    %v321 = vunpack.c.l.b16 %v65
    %v322 = vunpack.c.l.b16 %v66
    %v323 = vunpack.c.l.b16 %v67
    %v324 = vunpack.c.l.b16 %v68
    %v325 = vunpack.c.l.b16 %v69
    %v326 = vunpack.c.l.b16 %v70
    %v327 = vunpack.c.l.b16 %v71
    %v328 = vunpack.c.l.b16 %v72
    %v329 = vunpack.c.l.b16 %v73
    %v330 = vunpack.c.l.b16 %v74
    %v331 = vunpack.c.l.b16 %v75
    %v332 = vpack.c.b16 %v301, %v300
    %v333 = vpack.c.b16 %v303, %v302
    %v334 = vpack.c.b16 %v305, %v304
    %v335 = vpack.c.b16 %v307, %v306
    %v336 = vpack.c.b16 %v309, %v308
    %v337 = vpack.c.b16 %v311, %v310
    %v338 = vpack.c.b16 %v313, %v312
    %v339 = vpack.c.b16 %v315, %v314
    %v340 = vpack.c.b16 %v317, %v316
    %v341 = vpack.c.b16 %v319, %v318
    %v342 = vpack.c.b16 %v321, %v320
    %v343 = vpack.c.b16 %v323, %v322
    %v344 = vpack.c.b16 %v325, %v324
    %v345 = vpack.c.b16 %v327, %v326
    %v346 = vpack.c.b16 %v329, %v328
    %v347 = vpack.c.b16 %v331, %v330
    %vm348 = vcmask 121856
    %v350 = vsel %vm348, %v332, 0
    %v353 = vsel %vm348, %v333, 0
    %v356 = vsel %vm348, %v334, 0
    %v359 = vsel %vm348, %v335, 0
    %v362 = vsel %vm348, %v336, 0
    %v365 = vsel %vm348, %v337, 0
    %v368 = vsel %vm348, %v338, 0
    %v371 = vsel %vm348, %v339, 0
    %v374 = vsel %vm348, %v340, 0
    %v377 = vsel %vm348, %v341, 0
    %v380 = vsel %vm348, %v342, 0
    %v383 = vsel %vm348, %v343, 0
    %v386 = vsel %vm348, %v344, 0
    %v389 = vsel %vm348, %v345, 0
    %v392 = vsel %vm348, %v346, 0
    %v395 = vsel %vm348, %v347, 0
    %v398 = vsel %vm348, %v43, 0
    %400 = vmatprep.subr.bf16.mxu0 0
    %401 = vmatpush1.bf16.xpose.msra.mxu0 0
    %402 = vmatprep.subr.bf16.mxu0 0
    %403 = vmatpush1.bf16.xpose.msra.mxu0 0
    %404 = vmatprep.subr.bf16.mxu0 0
    %405 = vmatpush1.bf16.xpose.msra.mxu0 0
    %406 = vmatprep.subr.bf16.mxu0 0
    %407 = vmatpush1.bf16.xpose.msra.mxu0 0
    %408 = vmatprep.subr.bf16.mxu0 0
    %409 = vmatpush1.bf16.xpose.msra.mxu0 0
    %410 = vmatprep.subr.bf16.mxu0 0
    %411 = vmatpush1.bf16.xpose.msra.mxu0 0
    %412 = vmatprep.subr.bf16.mxu0 0
    %413 = vmatpush1.bf16.xpose.msra.mxu0 0
    %414 = vmatprep.subr.bf16.mxu0 0
    %415 = vmatpush1.bf16.xpose.msra.mxu0 %v398
    %416 = vmatprep.subr.bf16.mxu0 0
    %417 = vmatpush2.bf16.xpose.msra.mxu0 0
    %418 = vmatprep.subr.bf16.mxu0 0
    %419 = vmatpush2.bf16.xpose.msra.mxu0 0
    %420 = vmatprep.subr.bf16.mxu0 0
    %421 = vmatpush2.bf16.xpose.msra.mxu0 0
    %422 = vmatprep.subr.bf16.mxu0 0
    %423 = vmatpush2.bf16.xpose.msra.mxu0 0
    %424 = vmatprep.subr.bf16.mxu0 0
    %425 = vmatpush2.bf16.xpose.msra.mxu0 0
    %426 = vmatprep.subr.bf16.mxu0 0
    %427 = vmatpush2.bf16.xpose.msra.mxu0 0
    %428 = vmatprep.subr.bf16.mxu0 0
    %429 = vmatpush2.bf16.xpose.msra.mxu0 0
    %430 = vmatprep.subr.bf16.mxu0 0
    %431 = vmatpush2.bf16.xpose.msra.mxu0 0
    %432 = vmatprep.mubr.bf16.mxu0 0
    %433 = vmatmul.mubr.bf16.gmra.mxu0 %v350
    %v434 = vpop.f32.mrf.mxu0
    %v435 = vadd.f32 %v111, %v434
    %v436 = vpop.f32.mrf.mxu0
    %v437 = vpop.f32.mrf.mxu0
    %v438 = vadd.f32 %v116, %v437
    %v439 = vpop.f32.mrf.mxu0
    %440 = vmatprep.mubr.bf16.mxu0 0
    %441 = vmatmul.mubr.bf16.gmra.mxu0 %v353
    %v442 = vpop.f32.mrf.mxu0
    %v443 = vadd.f32 %v121, %v442
    %v444 = vpop.f32.mrf.mxu0
    %v445 = vpop.f32.mrf.mxu0
    %v446 = vadd.f32 %v126, %v445
    %v447 = vpop.f32.mrf.mxu0
    %448 = vmatprep.mubr.bf16.mxu0 0
    %449 = vmatmul.mubr.bf16.gmra.mxu0 %v356
    %v450 = vpop.f32.mrf.mxu0
    %v451 = vadd.f32 %v131, %v450
    %v452 = vpop.f32.mrf.mxu0
    %v453 = vpop.f32.mrf.mxu0
    %v454 = vadd.f32 %v136, %v453
    %v455 = vpop.f32.mrf.mxu0
    %456 = vmatprep.mubr.bf16.mxu0 0
    %457 = vmatmul.mubr.bf16.gmra.mxu0 %v359
    %v458 = vpop.f32.mrf.mxu0
    %v459 = vadd.f32 %v141, %v458
    %v460 = vpop.f32.mrf.mxu0
    %v461 = vpop.f32.mrf.mxu0
    %v462 = vadd.f32 %v146, %v461
    %v463 = vpop.f32.mrf.mxu0
    %464 = vmatprep.mubr.bf16.mxu0 0
    %465 = vmatmul.mubr.bf16.gmra.mxu0 %v362
    %v466 = vpop.f32.mrf.mxu0
    %v467 = vadd.f32 %v151, %v466
    %v468 = vpop.f32.mrf.mxu0
    %v469 = vpop.f32.mrf.mxu0
    %v470 = vadd.f32 %v156, %v469
    %v471 = vpop.f32.mrf.mxu0
    %472 = vmatprep.mubr.bf16.mxu0 0
    %473 = vmatmul.mubr.bf16.gmra.mxu0 %v365
    %v474 = vpop.f32.mrf.mxu0
    %v475 = vadd.f32 %v161, %v474
    %v476 = vpop.f32.mrf.mxu0
    %v477 = vpop.f32.mrf.mxu0
    %v478 = vadd.f32 %v166, %v477
    %v479 = vpop.f32.mrf.mxu0
    %480 = vmatprep.mubr.bf16.mxu0 0
    %481 = vmatmul.mubr.bf16.gmra.mxu0 %v368
    %v482 = vpop.f32.mrf.mxu0
    %v483 = vadd.f32 %v171, %v482
    %v484 = vpop.f32.mrf.mxu0
    %v485 = vpop.f32.mrf.mxu0
    %v486 = vadd.f32 %v176, %v485
    %v487 = vpop.f32.mrf.mxu0
    %488 = vmatprep.mubr.bf16.mxu0 0
    %489 = vmatmul.mubr.bf16.gmra.mxu0 %v371
    %v490 = vpop.f32.mrf.mxu0
    %v491 = vadd.f32 %v181, %v490
    %v492 = vpop.f32.mrf.mxu0
    %v493 = vpop.f32.mrf.mxu0
    %v494 = vadd.f32 %v186, %v493
    %v495 = vpop.f32.mrf.mxu0
    %496 = vmatprep.mubr.bf16.mxu0 0
    %497 = vmatmul.mubr.bf16.gmra.mxu0 %v374
    %v498 = vpop.f32.mrf.mxu0
    %v499 = vadd.f32 %v191, %v498
    %v500 = vpop.f32.mrf.mxu0
    %v501 = vpop.f32.mrf.mxu0
    %v502 = vadd.f32 %v196, %v501
    %v503 = vpop.f32.mrf.mxu0
    %504 = vmatprep.mubr.bf16.mxu0 0
    %505 = vmatmul.mubr.bf16.gmra.mxu0 %v377
    %v506 = vpop.f32.mrf.mxu0
    %v507 = vadd.f32 %v201, %v506
    %v508 = vpop.f32.mrf.mxu0
    %v509 = vpop.f32.mrf.mxu0
    %v510 = vadd.f32 %v206, %v509
    %v511 = vpop.f32.mrf.mxu0
    %512 = vmatprep.mubr.bf16.mxu0 0
    %513 = vmatmul.mubr.bf16.gmra.mxu0 %v380
    %v514 = vpop.f32.mrf.mxu0
    %v515 = vadd.f32 %v211, %v514
    %v516 = vpop.f32.mrf.mxu0
    %v517 = vpop.f32.mrf.mxu0
    %v518 = vadd.f32 %v216, %v517
    %v519 = vpop.f32.mrf.mxu0
    %520 = vmatprep.mubr.bf16.mxu0 0
    %521 = vmatmul.mubr.bf16.gmra.mxu0 %v383
    %v522 = vpop.f32.mrf.mxu0
    %v523 = vadd.f32 %v221, %v522
    %v524 = vpop.f32.mrf.mxu0
    %v525 = vpop.f32.mrf.mxu0
    %v526 = vadd.f32 %v226, %v525
    %v527 = vpop.f32.mrf.mxu0
    %528 = vmatprep.mubr.bf16.mxu0 0
    %529 = vmatmul.mubr.bf16.gmra.mxu0 %v386
    %v530 = vpop.f32.mrf.mxu0
    %v531 = vadd.f32 %v231, %v530
    %v532 = vpop.f32.mrf.mxu0
    %v533 = vpop.f32.mrf.mxu0
    %v534 = vadd.f32 %v236, %v533
    %v535 = vpop.f32.mrf.mxu0
    %536 = vmatprep.mubr.bf16.mxu0 0
    %537 = vmatmul.mubr.bf16.gmra.mxu0 %v389
    %v538 = vpop.f32.mrf.mxu0
    %v539 = vadd.f32 %v241, %v538
    %v540 = vpop.f32.mrf.mxu0
    %v541 = vpop.f32.mrf.mxu0
    %v542 = vadd.f32 %v246, %v541
    %v543 = vpop.f32.mrf.mxu0
    %544 = vmatprep.mubr.bf16.mxu0 0
    %545 = vmatmul.mubr.bf16.gmra.mxu0 %v392
    %v546 = vpop.f32.mrf.mxu0
    %v547 = vadd.f32 %v251, %v546
    %v548 = vpop.f32.mrf.mxu0
    %v549 = vpop.f32.mrf.mxu0
    %v550 = vadd.f32 %v256, %v549
    %v551 = vpop.f32.mrf.mxu0
    %552 = vmatprep.mubr.bf16.mxu0 0
    %553 = vmatmul.mubr.bf16.gmra.mxu0 %v395
    %v554 = vpop.f32.mrf.mxu0
    %v555 = vadd.f32 %v261, %v554
    %v556 = vpop.f32.mrf.mxu0
    %v557 = vpop.f32.mrf.mxu0
    %v558 = vadd.f32 %v266, %v557
    %v559 = vpop.f32.mrf.mxu0
    %560 = vdwg.mxu0
    %v561 = vmul.f32 %v435, 0.2
    %v562 = vmul.f32 %v438, 0.2
    %v563 = vmul.f32 %v443, 0.2
    %v564 = vmul.f32 %v446, 0.2
    %v565 = vmul.f32 %v451, 0.2
    %v566 = vmul.f32 %v454, 0.2
    %v567 = vmul.f32 %v459, 0.2
    %v568 = vmul.f32 %v462, 0.2
    %v569 = vmul.f32 %v467, 0.2
    %v570 = vmul.f32 %v470, 0.2
    %v571 = vmul.f32 %v475, 0.2
    %v572 = vmul.f32 %v478, 0.2
    %v573 = vmul.f32 %v483, 0.2
    %v574 = vmul.f32 %v486, 0.2
    %v575 = vmul.f32 %v491, 0.2
    %v576 = vmul.f32 %v494, 0.2
    %v577 = vmul.f32 %v499, 0.2
    %v578 = vmul.f32 %v502, 0.2
    %v579 = vmul.f32 %v507, 0.2
    %v580 = vmul.f32 %v510, 0.2
    %v581 = vmul.f32 %v515, 0.2
    %v582 = vmul.f32 %v518, 0.2
    %v583 = vmul.f32 %v523, 0.2
    %v584 = vmul.f32 %v526, 0.2
    %v585 = vmul.f32 %v531, 0.2
    %v586 = vmul.f32 %v534, 0.2
    %v587 = vmul.f32 %v539, 0.2
    %v588 = vmul.f32 %v542, 0.2
    %v589 = vmul.f32 %v547, 0.2
    %v590 = vmul.f32 %v550, 0.2
    %v591 = vmul.f32 %v555, 0.2
    %v592 = vmul.f32 %v558, 0.2
    %v593 = vmax.f32 %v435, %v561
    %v594 = vmax.f32 %v438, %v562
    %v595 = vmax.f32 %v443, %v563
    %v596 = vmax.f32 %v446, %v564
    %v597 = vmax.f32 %v451, %v565
    %v598 = vmax.f32 %v454, %v566
    %v599 = vmax.f32 %v459, %v567
    %v600 = vmax.f32 %v462, %v568
    %v601 = vmax.f32 %v467, %v569
    %v602 = vmax.f32 %v470, %v570
    %v603 = vmax.f32 %v475, %v571
    %v604 = vmax.f32 %v478, %v572
    %v605 = vmax.f32 %v483, %v573
    %v606 = vmax.f32 %v486, %v574
    %v607 = vmax.f32 %v491, %v575
    %v608 = vmax.f32 %v494, %v576
    %v609 = vmax.f32 %v499, %v577
    %v610 = vmax.f32 %v502, %v578
    %v611 = vmax.f32 %v507, %v579
    %v612 = vmax.f32 %v510, %v580
    %v613 = vmax.f32 %v515, %v581
    %v614 = vmax.f32 %v518, %v582
    %v615 = vmax.f32 %v523, %v583
    %v616 = vmax.f32 %v526, %v584
    %v617 = vmax.f32 %v531, %v585
    %v618 = vmax.f32 %v534, %v586
    %v619 = vmax.f32 %v539, %v587
    %v620 = vmax.f32 %v542, %v588
    %v621 = vmax.f32 %v547, %v589
    %v622 = vmax.f32 %v550, %v590
    %v623 = vmax.f32 %v555, %v591
    %v624 = vmax.f32 %v558, %v592
    %v625 = vld [vmem:[%s3] sm:$0xff]
    %v626 = vld [vmem:[%s3 + $0x8] sm:$0xff]
    %v627 = vld [vmem:[%s3 + $0x10] sm:$0xff]
    %v628 = vld [vmem:[%s3 + $0x18] sm:$0xff]
    %v629 = vld [vmem:[%s3 + $0x20] sm:$0xff]
    %v630 = vld [vmem:[%s3 + $0x28] sm:$0xff]
    %v631 = vld [vmem:[%s3 + $0x30] sm:$0xff]
    %v632 = vld [vmem:[%s3 + $0x38] sm:$0xff]
    %v633 = vld [vmem:[%s3 + $0x40] sm:$0xff]
    %v634 = vld [vmem:[%s3 + $0x48] sm:$0xff]
    %v635 = vld [vmem:[%s3 + $0x50] sm:$0xff]
    %v636 = vld [vmem:[%s3 + $0x58] sm:$0xff]
    %v637 = vld [vmem:[%s3 + $0x60] sm:$0xff]
    %v638 = vld [vmem:[%s3 + $0x68] sm:$0xff]
    %v639 = vld [vmem:[%s3 + $0x70] sm:$0xff]
    %v640 = vld [vmem:[%s3 + $0x78] sm:$0xff]
    %v641 = vpack.c.bf16 %v594, %v593
    %v642 = vpack.c.bf16 %v596, %v595
    %v643 = vpack.c.bf16 %v598, %v597
    %v644 = vpack.c.bf16 %v600, %v599
    %v645 = vpack.c.bf16 %v602, %v601
    %v646 = vpack.c.bf16 %v604, %v603
    %v647 = vpack.c.bf16 %v606, %v605
    %v648 = vpack.c.bf16 %v608, %v607
    %v649 = vpack.c.bf16 %v610, %v609
    %v650 = vpack.c.bf16 %v612, %v611
    %v651 = vpack.c.bf16 %v614, %v613
    %v652 = vpack.c.bf16 %v616, %v615
    %v653 = vpack.c.bf16 %v618, %v617
    %v654 = vpack.c.bf16 %v620, %v619
    %v655 = vpack.c.bf16 %v622, %v621
    %v656 = vpack.c.bf16 %v624, %v623
    %v657 = vld [vmem:[%s4] sm:$0xff]
    %v658 = vld [vmem:[%s4 + $0x8] sm:$0xff]
    %v659 = vld [vmem:[%s4 + $0x10] sm:$0xff]
    %v660 = vld [vmem:[%s4 + $0x18] sm:$0xff]
    %v661 = vld [vmem:[%s4 + $0x20] sm:$0xff]
    %v662 = vld [vmem:[%s4 + $0x28] sm:$0xff]
    %v663 = vld [vmem:[%s4 + $0x30] sm:$0xff]
    %v664 = vld [vmem:[%s4 + $0x38] sm:$0xff]
    %v665 = vld [vmem:[%s4 + $0x40] sm:$0xff]
    %v666 = vld [vmem:[%s4 + $0x48] sm:$0xff]
    %v667 = vld [vmem:[%s4 + $0x50] sm:$0xff]
    %v668 = vld [vmem:[%s4 + $0x58] sm:$0xff]
    %v669 = vld [vmem:[%s4 + $0x60] sm:$0xff]
    %v670 = vld [vmem:[%s4 + $0x68] sm:$0xff]
    %v671 = vld [vmem:[%s4 + $0x70] sm:$0xff]
    %v672 = vld [vmem:[%s4 + $0x78] sm:$0xff]
    %674 = vset.pattern.permute.xlu0 0
    %675 = vperm.xlu0 %674, %v657
    %v676 = vpop.permute.xlu0 %675
    %679 = vset.pattern.permute.xlu0 0
    %680 = vperm.xlu0 %679, %v658
    %v681 = vpop.permute.xlu0 %680
    %684 = vset.pattern.permute.xlu0 0
    %685 = vperm.xlu0 %684, %v659
    %v686 = vpop.permute.xlu0 %685
    %689 = vset.pattern.permute.xlu0 0
    %690 = vperm.xlu0 %689, %v660
    %v691 = vpop.permute.xlu0 %690
    %694 = vset.pattern.permute.xlu0 0
    %695 = vperm.xlu0 %694, %v661
    %v696 = vpop.permute.xlu0 %695
    %699 = vset.pattern.permute.xlu0 0
    %700 = vperm.xlu0 %699, %v662
    %v701 = vpop.permute.xlu0 %700
    %704 = vset.pattern.permute.xlu0 0
    %705 = vperm.xlu0 %704, %v663
    %v706 = vpop.permute.xlu0 %705
    %709 = vset.pattern.permute.xlu0 0
    %710 = vperm.xlu0 %709, %v664
    %v711 = vpop.permute.xlu0 %710
    %714 = vset.pattern.permute.xlu0 0
    %715 = vperm.xlu0 %714, %v665
    %v716 = vpop.permute.xlu0 %715
    %719 = vset.pattern.permute.xlu0 0
    %720 = vperm.xlu0 %719, %v666
    %v721 = vpop.permute.xlu0 %720
    %724 = vset.pattern.permute.xlu0 0
    %725 = vperm.xlu0 %724, %v667
    %v726 = vpop.permute.xlu0 %725
    %729 = vset.pattern.permute.xlu0 0
    %730 = vperm.xlu0 %729, %v668
    %v731 = vpop.permute.xlu0 %730
    %734 = vset.pattern.permute.xlu0 0
    %735 = vperm.xlu0 %734, %v669
    %v736 = vpop.permute.xlu0 %735
    %739 = vset.pattern.permute.xlu0 0
    %740 = vperm.xlu0 %739, %v670
    %v741 = vpop.permute.xlu0 %740
    %744 = vset.pattern.permute.xlu0 0
    %745 = vperm.xlu0 %744, %v671
    %v746 = vpop.permute.xlu0 %745
    %749 = vset.pattern.permute.xlu0 0
    %750 = vperm.xlu0 %749, %v672
    %v751 = vpop.permute.xlu0 %750
    %v769 = vunpack.c.l.b16 %v625
    %v770 = vunpack.c.h.b16 %v625
    %v771 = vunpack.c.l.b16 %v626
    %v772 = vunpack.c.h.b16 %v626
    %v773 = vunpack.c.l.b16 %v627
    %v774 = vunpack.c.h.b16 %v627
    %v775 = vunpack.c.l.b16 %v628
    %v776 = vunpack.c.h.b16 %v628
    %v777 = vunpack.c.l.b16 %v629
    %v778 = vunpack.c.h.b16 %v629
    %v779 = vunpack.c.l.b16 %v630
    %v780 = vunpack.c.h.b16 %v630
    %v781 = vunpack.c.l.b16 %v631
    %v782 = vunpack.c.h.b16 %v631
    %v783 = vunpack.c.l.b16 %v632
    %v784 = vunpack.c.h.b16 %v632
    %v785 = vunpack.c.l.b16 %v633
    %v786 = vunpack.c.h.b16 %v633
    %v787 = vunpack.c.l.b16 %v634
    %v788 = vunpack.c.h.b16 %v634
    %v789 = vunpack.c.l.b16 %v635
    %v790 = vunpack.c.h.b16 %v635
    %v791 = vunpack.c.l.b16 %v636
    %v792 = vunpack.c.h.b16 %v636
    %v793 = vunpack.c.l.b16 %v637
    %v794 = vunpack.c.h.b16 %v637
    %v795 = vunpack.c.l.b16 %v638
    %v796 = vunpack.c.h.b16 %v638
    %v797 = vunpack.c.l.b16 %v639
    %v798 = vunpack.c.h.b16 %v639
    %v799 = vunpack.c.l.b16 %v640
    %v800 = vunpack.c.h.b16 %v640
    %v801 = vpack.c.b16 %v771, %v769
    %v802 = vpack.c.b16 %v772, %v770
    %v803 = vpack.c.b16 %v775, %v773
    %v804 = vpack.c.b16 %v776, %v774
    %v805 = vpack.c.b16 %v779, %v777
    %v806 = vpack.c.b16 %v780, %v778
    %v807 = vpack.c.b16 %v783, %v781
    %v808 = vpack.c.b16 %v784, %v782
    %v809 = vpack.c.b16 %v787, %v785
    %v810 = vpack.c.b16 %v788, %v786
    %v811 = vpack.c.b16 %v791, %v789
    %v812 = vpack.c.b16 %v792, %v790
    %v813 = vpack.c.b16 %v795, %v793
    %v814 = vpack.c.b16 %v796, %v794
    %v815 = vpack.c.b16 %v799, %v797
    %v816 = vpack.c.b16 %v800, %v798
    %833 = vmatprep.subr.bf16.mxu0 0
    %834 = vmatpush1.bf16.msra.mxu0 %v648
    %835 = vmatprep.subr.bf16.mxu0 0
    %836 = vmatpush1.bf16.msra.mxu0 %v647
    %837 = vmatprep.subr.bf16.mxu0 0
    %838 = vmatpush1.bf16.msra.mxu0 %v646
    %839 = vmatprep.subr.bf16.mxu0 0
    %840 = vmatpush1.bf16.msra.mxu0 %v645
    %841 = vmatprep.subr.bf16.mxu0 0
    %842 = vmatpush1.bf16.msra.mxu0 %v644
    %843 = vmatprep.subr.bf16.mxu0 0
    %844 = vmatpush1.bf16.msra.mxu0 %v643
    %845 = vmatprep.subr.bf16.mxu0 0
    %846 = vmatpush1.bf16.msra.mxu0 %v642
    %847 = vmatprep.subr.bf16.mxu0 0
    %848 = vmatpush1.bf16.msra.mxu0 %v641
    %849 = vmatprep.subr.bf16.mxu0 0
    %850 = vmatpush2.bf16.msra.mxu0 %v656
    %851 = vmatprep.subr.bf16.mxu0 0
    %852 = vmatpush2.bf16.msra.mxu0 %v655
    %853 = vmatprep.subr.bf16.mxu0 0
    %854 = vmatpush2.bf16.msra.mxu0 %v654
    %855 = vmatprep.subr.bf16.mxu0 0
    %856 = vmatpush2.bf16.msra.mxu0 %v653
    %857 = vmatprep.subr.bf16.mxu0 0
    %858 = vmatpush2.bf16.msra.mxu0 %v652
    %859 = vmatprep.subr.bf16.mxu0 0
    %860 = vmatpush2.bf16.msra.mxu0 %v651
    %861 = vmatprep.subr.bf16.mxu0 0
    %862 = vmatpush2.bf16.msra.mxu0 %v650
    %863 = vmatprep.subr.bf16.mxu0 0
    %864 = vmatpush2.bf16.msra.mxu0 %v649
    %865 = vmatprep.mubr.bf16.mxu0 %v802
    %866 = vmatmul.mubr.bf16.gmra.mxu0 %v801
    %v867 = vpop.f32.mrf.mxu0
    %v868 = vadd.f32 %v676, %v867
    %v869 = vpop.f32.mrf.mxu0
    %v870 = vpop.f32.mrf.mxu0
    %v871 = vadd.f32 %v681, %v870
    %v872 = vpop.f32.mrf.mxu0
    %873 = vmatprep.mubr.bf16.mxu0 %v804
    %874 = vmatmul.mubr.bf16.gmra.mxu0 %v803
    %v875 = vpop.f32.mrf.mxu0
    %v876 = vadd.f32 %v686, %v875
    %v877 = vpop.f32.mrf.mxu0
    %v878 = vpop.f32.mrf.mxu0
    %v879 = vadd.f32 %v691, %v878
    %v880 = vpop.f32.mrf.mxu0
    %881 = vmatprep.mubr.bf16.mxu0 %v806
    %882 = vmatmul.mubr.bf16.gmra.mxu0 %v805
    %v883 = vpop.f32.mrf.mxu0
    %v884 = vadd.f32 %v696, %v883
    %v885 = vpop.f32.mrf.mxu0
    %v886 = vpop.f32.mrf.mxu0
    %v887 = vadd.f32 %v701, %v886
    %v888 = vpop.f32.mrf.mxu0
    %889 = vmatprep.mubr.bf16.mxu0 %v808
    %890 = vmatmul.mubr.bf16.gmra.mxu0 %v807
    %v891 = vpop.f32.mrf.mxu0
    %v892 = vadd.f32 %v706, %v891
    %v893 = vpop.f32.mrf.mxu0
    %v894 = vpop.f32.mrf.mxu0
    %v895 = vadd.f32 %v711, %v894
    %v896 = vpop.f32.mrf.mxu0
    %897 = vmatprep.mubr.bf16.mxu0 %v810
    %898 = vmatmul.mubr.bf16.gmra.mxu0 %v809
    %v899 = vpop.f32.mrf.mxu0
    %v900 = vadd.f32 %v716, %v899
    %v901 = vpop.f32.mrf.mxu0
    %v902 = vpop.f32.mrf.mxu0
    %v903 = vadd.f32 %v721, %v902
    %v904 = vpop.f32.mrf.mxu0
    %905 = vmatprep.mubr.bf16.mxu0 %v812
    %906 = vmatmul.mubr.bf16.gmra.mxu0 %v811
    %v907 = vpop.f32.mrf.mxu0
    %v908 = vadd.f32 %v726, %v907
    %v909 = vpop.f32.mrf.mxu0
    %v910 = vpop.f32.mrf.mxu0
    %v911 = vadd.f32 %v731, %v910
    %v912 = vpop.f32.mrf.mxu0
    %913 = vmatprep.mubr.bf16.mxu0 %v814
    %914 = vmatmul.mubr.bf16.gmra.mxu0 %v813
    %v915 = vpop.f32.mrf.mxu0
    %v916 = vadd.f32 %v736, %v915
    %v917 = vpop.f32.mrf.mxu0
    %v918 = vpop.f32.mrf.mxu0
    %v919 = vadd.f32 %v741, %v918
    %v920 = vpop.f32.mrf.mxu0
    %921 = vmatprep.mubr.bf16.mxu0 %v816
    %922 = vmatmul.mubr.bf16.gmra.mxu0 %v815
    %v923 = vpop.f32.mrf.mxu0
    %v924 = vadd.f32 %v746, %v923
    %v925 = vpop.f32.mrf.mxu0
    %v926 = vpop.f32.mrf.mxu0
    %v927 = vadd.f32 %v751, %v926
    %v928 = vpop.f32.mrf.mxu0
    %929 = vdwg.mxu0
    %v930 = vmul.f32 %v868, 0.2
    %v931 = vmul.f32 %v871, 0.2
    %v932 = vmul.f32 %v876, 0.2
    %v933 = vmul.f32 %v879, 0.2
    %v934 = vmul.f32 %v884, 0.2
    %v935 = vmul.f32 %v887, 0.2
    %v936 = vmul.f32 %v892, 0.2
    %v937 = vmul.f32 %v895, 0.2
    %v938 = vmul.f32 %v900, 0.2
    %v939 = vmul.f32 %v903, 0.2
    %v940 = vmul.f32 %v908, 0.2
    %v941 = vmul.f32 %v911, 0.2
    %v942 = vmul.f32 %v916, 0.2
    %v943 = vmul.f32 %v919, 0.2
    %v944 = vmul.f32 %v924, 0.2
    %v945 = vmul.f32 %v927, 0.2
    %v946 = vmax.f32 %v868, %v930
    %v947 = vmax.f32 %v871, %v931
    %v948 = vmax.f32 %v876, %v932
    %v949 = vmax.f32 %v879, %v933
    %v950 = vmax.f32 %v884, %v934
    %v951 = vmax.f32 %v887, %v935
    %v952 = vmax.f32 %v892, %v936
    %v953 = vmax.f32 %v895, %v937
    %v954 = vmax.f32 %v900, %v938
    %v955 = vmax.f32 %v903, %v939
    %v956 = vmax.f32 %v908, %v940
    %v957 = vmax.f32 %v911, %v941
    %v958 = vmax.f32 %v916, %v942
    %v959 = vmax.f32 %v919, %v943
    %v960 = vmax.f32 %v924, %v944
    %v961 = vmax.f32 %v927, %v945
    %v962 = vld [vmem:[%s5] sm:$0xf]
    %v963 = vld [vmem:[%s5 + $0x4] sm:$0xf]
    %v964 = vld [vmem:[%s5 + $0x8] sm:$0xf]
    %v965 = vld [vmem:[%s5 + $0xc] sm:$0xf]
    %v966 = vld [vmem:[%s5 + $0x10] sm:$0xf]
    %v967 = vld [vmem:[%s5 + $0x14] sm:$0xf]
    %v968 = vld [vmem:[%s5 + $0x18] sm:$0xf]
    %v969 = vld [vmem:[%s5 + $0x1c] sm:$0xf]
    %v970 = vpack.c.bf16 %v947, %v946
    %v971 = vpack.c.bf16 %v949, %v948
    %v972 = vpack.c.bf16 %v951, %v950
    %v973 = vpack.c.bf16 %v953, %v952
    %v974 = vpack.c.bf16 %v955, %v954
    %v975 = vpack.c.bf16 %v957, %v956
    %v976 = vpack.c.bf16 %v959, %v958
    %v977 = vpack.c.bf16 %v961, %v960
    %v978 = vld [vmem:[%s6] sm:$0xff]
    %v979 = vld [vmem:[%s6 + $0x8] sm:$0xff]
    %v980 = vld [vmem:[%s6 + $0x10] sm:$0xff]
    %v981 = vld [vmem:[%s6 + $0x18] sm:$0xff]
    %v982 = vld [vmem:[%s6 + $0x20] sm:$0xff]
    %v983 = vld [vmem:[%s6 + $0x28] sm:$0xff]
    %v984 = vld [vmem:[%s6 + $0x30] sm:$0xff]
    %v985 = vld [vmem:[%s6 + $0x38] sm:$0xff]
    %987 = vset.pattern.permute.xlu0 0
    %988 = vperm.xlu0 %987, %v978
    %v989 = vpop.permute.xlu0 %988
    %992 = vset.pattern.permute.xlu0 0
    %993 = vperm.xlu0 %992, %v979
    %v994 = vpop.permute.xlu0 %993
    %997 = vset.pattern.permute.xlu0 0
    %998 = vperm.xlu0 %997, %v980
    %v999 = vpop.permute.xlu0 %998
    %1002 = vset.pattern.permute.xlu0 0
    %1003 = vperm.xlu0 %1002, %v981
    %v1004 = vpop.permute.xlu0 %1003
    %1007 = vset.pattern.permute.xlu0 0
    %1008 = vperm.xlu0 %1007, %v982
    %v1009 = vpop.permute.xlu0 %1008
    %1012 = vset.pattern.permute.xlu0 0
    %1013 = vperm.xlu0 %1012, %v983
    %v1014 = vpop.permute.xlu0 %1013
    %1017 = vset.pattern.permute.xlu0 0
    %1018 = vperm.xlu0 %1017, %v984
    %v1019 = vpop.permute.xlu0 %1018
    %1022 = vset.pattern.permute.xlu0 0
    %1023 = vperm.xlu0 %1022, %v985
    %v1024 = vpop.permute.xlu0 %1023
    %v1034 = vunpack.c.l.b16 %v962
    %v1035 = vunpack.c.l.b16 %v963
    %v1036 = vunpack.c.l.b16 %v964
    %v1037 = vunpack.c.l.b16 %v965
    %v1038 = vunpack.c.l.b16 %v966
    %v1039 = vunpack.c.l.b16 %v967
    %v1040 = vunpack.c.l.b16 %v968
    %v1041 = vunpack.c.l.b16 %v969
    %v1042 = vpack.c.b16 %v1035, %v1034
    %v1043 = vpack.c.b16 %v1037, %v1036
    %v1044 = vpack.c.b16 %v1039, %v1038
    %v1045 = vpack.c.b16 %v1041, %v1040
    %1050 = vmatprep.subr.bf16.mxu0 0
    %1051 = vmatpush1.bf16.msra.mxu0 %v977
    %1052 = vmatprep.subr.bf16.mxu0 0
    %1053 = vmatpush1.bf16.msra.mxu0 %v976
    %1054 = vmatprep.subr.bf16.mxu0 0
    %1055 = vmatpush1.bf16.msra.mxu0 %v975
    %1056 = vmatprep.subr.bf16.mxu0 0
    %1057 = vmatpush1.bf16.msra.mxu0 %v974
    %1058 = vmatprep.subr.bf16.mxu0 0
    %1059 = vmatpush1.bf16.msra.mxu0 %v973
    %1060 = vmatprep.subr.bf16.mxu0 0
    %1061 = vmatpush1.bf16.msra.mxu0 %v972
    %1062 = vmatprep.subr.bf16.mxu0 0
    %1063 = vmatpush1.bf16.msra.mxu0 %v971
    %1064 = vmatprep.subr.bf16.mxu0 0
    %1065 = vmatpush1.bf16.msra.mxu0 %v970
    %1066 = vmatprep.subr.bf16.mxu0 0
    %1067 = vmatpush2.bf16.msra.mxu0 0
    %1068 = vmatprep.subr.bf16.mxu0 0
    %1069 = vmatpush2.bf16.msra.mxu0 0
    %1070 = vmatprep.subr.bf16.mxu0 0
    %1071 = vmatpush2.bf16.msra.mxu0 0
    %1072 = vmatprep.subr.bf16.mxu0 0
    %1073 = vmatpush2.bf16.msra.mxu0 0
    %1074 = vmatprep.subr.bf16.mxu0 0
    %1075 = vmatpush2.bf16.msra.mxu0 0
    %1076 = vmatprep.subr.bf16.mxu0 0
    %1077 = vmatpush2.bf16.msra.mxu0 0
    %1078 = vmatprep.subr.bf16.mxu0 0
    %1079 = vmatpush2.bf16.msra.mxu0 0
    %1080 = vmatprep.subr.bf16.mxu0 0
    %1081 = vmatpush2.bf16.msra.mxu0 0
    %1082 = vmatprep.mubr.bf16.mxu0 0
    %1083 = vmatmul.mubr.bf16.gmra.mxu0 %v1042
    %v1084 = vpop.f32.mrf.mxu0
    %v1085 = vadd.f32 %v989, %v1084
    %v1086 = vpop.f32.mrf.mxu0
    %v1087 = vpop.f32.mrf.mxu0
    %v1088 = vadd.f32 %v994, %v1087
    %v1089 = vpop.f32.mrf.mxu0
    %1090 = vmatprep.mubr.bf16.mxu0 0
    %1091 = vmatmul.mubr.bf16.gmra.mxu0 %v1043
    %v1092 = vpop.f32.mrf.mxu0
    %v1093 = vadd.f32 %v999, %v1092
    %v1094 = vpop.f32.mrf.mxu0
    %v1095 = vpop.f32.mrf.mxu0
    %v1096 = vadd.f32 %v1004, %v1095
    %v1097 = vpop.f32.mrf.mxu0
    %1098 = vmatprep.mubr.bf16.mxu0 0
    %1099 = vmatmul.mubr.bf16.gmra.mxu0 %v1044
    %v1100 = vpop.f32.mrf.mxu0
    %v1101 = vadd.f32 %v1009, %v1100
    %v1102 = vpop.f32.mrf.mxu0
    %v1103 = vpop.f32.mrf.mxu0
    %v1104 = vadd.f32 %v1014, %v1103
    %v1105 = vpop.f32.mrf.mxu0
    %1106 = vmatprep.mubr.bf16.mxu0 0
    %1107 = vmatmul.mubr.bf16.gmra.mxu0 %v1045
    %v1108 = vpop.f32.mrf.mxu0
    %v1109 = vadd.f32 %v1019, %v1108
    %v1110 = vpop.f32.mrf.mxu0
    %v1111 = vpop.f32.mrf.mxu0
    %v1112 = vadd.f32 %v1024, %v1111
    %v1113 = vpop.f32.mrf.mxu0
    %1114 = vdwg.mxu0
    %v1115 = vmul.f32 %v1085, 0.2
    %v1116 = vmul.f32 %v1088, 0.2
    %v1117 = vmul.f32 %v1093, 0.2
    %v1118 = vmul.f32 %v1096, 0.2
    %v1119 = vmul.f32 %v1101, 0.2
    %v1120 = vmul.f32 %v1104, 0.2
    %v1121 = vmul.f32 %v1109, 0.2
    %v1122 = vmul.f32 %v1112, 0.2
    %v1123 = vmax.f32 %v1085, %v1115
    %v1124 = vmax.f32 %v1088, %v1116
    %v1125 = vmax.f32 %v1093, %v1117
    %v1126 = vmax.f32 %v1096, %v1118
    %v1127 = vmax.f32 %v1101, %v1119
    %v1128 = vmax.f32 %v1104, %v1120
    %v1129 = vmax.f32 %v1109, %v1121
    %v1130 = vmax.f32 %v1112, %v1122
    %v1131 = vld [vmem:[%s7] sm:$0xf]
    %v1132 = vld [vmem:[%s7 + $0x4] sm:$0xf]
    %v1133 = vld [vmem:[%s7 + $0x8] sm:$0xf]
    %v1134 = vld [vmem:[%s7 + $0xc] sm:$0xf]
    %v1135 = vpack.c.bf16 %v1124, %v1123
    %v1136 = vpack.c.bf16 %v1126, %v1125
    %v1137 = vpack.c.bf16 %v1128, %v1127
    %v1138 = vpack.c.bf16 %v1130, %v1129
    %v1139 = vld [vmem:[%s8] sm:$0xff]
    %v1140 = vld [vmem:[%s8 + $0x8] sm:$0xff]
    %v1141 = vld [vmem:[%s8 + $0x10] sm:$0xff]
    %v1142 = vld [vmem:[%s8 + $0x18] sm:$0xff]
    %1144 = vset.pattern.permute.xlu0 0
    %1145 = vperm.xlu0 %1144, %v1139
    %v1146 = vpop.permute.xlu0 %1145
    %1149 = vset.pattern.permute.xlu0 0
    %1150 = vperm.xlu0 %1149, %v1140
    %v1151 = vpop.permute.xlu0 %1150
    %1154 = vset.pattern.permute.xlu0 0
    %1155 = vperm.xlu0 %1154, %v1141
    %v1156 = vpop.permute.xlu0 %1155
    %1159 = vset.pattern.permute.xlu0 0
    %1160 = vperm.xlu0 %1159, %v1142
    %v1161 = vpop.permute.xlu0 %1160
    %v1167 = vunpack.c.l.b16 %v1131
    %v1168 = vunpack.c.l.b16 %v1132
    %v1169 = vunpack.c.l.b16 %v1133
    %v1170 = vunpack.c.l.b16 %v1134
    %v1171 = vpack.c.b16 %v1168, %v1167
    %v1172 = vpack.c.b16 %v1170, %v1169
    %vm1173 = vcmask 523264
    %v1175 = vsel %vm1173, %v1171, 0
    %v1178 = vsel %vm1173, %v1172, 0
    %1180 = vmatprep.subr.bf16.mxu0 0
    %1181 = vmatpush1.bf16.msra.mxu0 0
    %1182 = vmatprep.subr.bf16.mxu0 0
    %1183 = vmatpush1.bf16.msra.mxu0 0
    %1184 = vmatprep.subr.bf16.mxu0 0
    %1185 = vmatpush1.bf16.msra.mxu0 0
    %1186 = vmatprep.subr.bf16.mxu0 0
    %1187 = vmatpush1.bf16.msra.mxu0 0
    %1188 = vmatprep.subr.bf16.mxu0 0
    %1189 = vmatpush1.bf16.msra.mxu0 %v1138
    %1190 = vmatprep.subr.bf16.mxu0 0
    %1191 = vmatpush1.bf16.msra.mxu0 %v1137
    %1192 = vmatprep.subr.bf16.mxu0 0
    %1193 = vmatpush1.bf16.msra.mxu0 %v1136
    %1194 = vmatprep.subr.bf16.mxu0 0
    %1195 = vmatpush1.bf16.msra.mxu0 %v1135
    %1196 = vmatprep.subr.bf16.mxu0 0
    %1197 = vmatpush2.bf16.msra.mxu0 0
    %1198 = vmatprep.subr.bf16.mxu0 0
    %1199 = vmatpush2.bf16.msra.mxu0 0
    %1200 = vmatprep.subr.bf16.mxu0 0
    %1201 = vmatpush2.bf16.msra.mxu0 0
    %1202 = vmatprep.subr.bf16.mxu0 0
    %1203 = vmatpush2.bf16.msra.mxu0 0
    %1204 = vmatprep.subr.bf16.mxu0 0
    %1205 = vmatpush2.bf16.msra.mxu0 0
    %1206 = vmatprep.subr.bf16.mxu0 0
    %1207 = vmatpush2.bf16.msra.mxu0 0
    %1208 = vmatprep.subr.bf16.mxu0 0
    %1209 = vmatpush2.bf16.msra.mxu0 0
    %1210 = vmatprep.subr.bf16.mxu0 0
    %1211 = vmatpush2.bf16.msra.mxu0 0
    %1212 = vmatprep.mubr.bf16.mxu0 0
    %1213 = vmatmul.mubr.bf16.gmra.mxu0 %v1175
    %v1214 = vpop.f32.mrf.mxu0
    %v1215 = vadd.f32 %v1146, %v1214
    %v1216 = vpop.f32.mrf.mxu0
    %v1217 = vpop.f32.mrf.mxu0
    %v1218 = vadd.f32 %v1151, %v1217
    %v1219 = vpop.f32.mrf.mxu0
    %1220 = vmatprep.mubr.bf16.mxu0 0
    %1221 = vmatmul.mubr.bf16.gmra.mxu0 %v1178
    %v1222 = vpop.f32.mrf.mxu0
    %v1223 = vadd.f32 %v1156, %v1222
    %v1224 = vpop.f32.mrf.mxu0
    %v1225 = vpop.f32.mrf.mxu0
    %v1226 = vadd.f32 %v1161, %v1225
    %v1227 = vpop.f32.mrf.mxu0
    %1228 = vdwg.mxu0
    %v1229 = vmul.f32 %v1215, 0.2
    %v1230 = vmul.f32 %v1218, 0.2
    %v1231 = vmul.f32 %v1223, 0.2
    %v1232 = vmul.f32 %v1226, 0.2
    %v1233 = vmax.f32 %v1215, %v1229
    %v1234 = vmax.f32 %v1218, %v1230
    %v1235 = vmax.f32 %v1223, %v1231
    %v1236 = vmax.f32 %v1226, %v1232
    %v1237 = vld [vmem:[%s9] sm:$0xff]
    %v1238 = vld [vmem:[%s9 + $0x8] sm:$0xff]
    %v1239 = vld [vmem:[%s9 + $0x10] sm:$0xff]
    %v1240 = vld [vmem:[%s9 + $0x18] sm:$0xff]
    %1242 = vset.pattern.permute.xlu0 0
    %1243 = vperm.xlu0 %1242, %v1237
    %v1244 = vpop.permute.xlu0 %1243
    %1247 = vset.pattern.permute.xlu0 0
    %1248 = vperm.xlu0 %1247, %v1238
    %v1249 = vpop.permute.xlu0 %1248
    %1252 = vset.pattern.permute.xlu0 0
    %1253 = vperm.xlu0 %1252, %v1239
    %v1254 = vpop.permute.xlu0 %1253
    %1257 = vset.pattern.permute.xlu0 0
    %1258 = vperm.xlu0 %1257, %v1240
    %v1259 = vpop.permute.xlu0 %1258
    %v1261 = vmul.f32 %v1233, %v1244
    %v1262 = vmul.f32 %v1234, %v1249
    %v1263 = vmul.f32 %v1235, %v1254
    %v1264 = vmul.f32 %v1236, %v1259
    %vm1265 = vcmask 31744
    %v1266 = vsel %vm1265, %v1261, 0.0
    %v1267 = vsel %vm1265, %v1262, 0.0
    %v1268 = vadd.f32 %v1266, %v1267
    %v1269 = vsel %vm1265, %v1263, 0.0
    %v1270 = vadd.f32 %v1268, %v1269
    %v1271 = vsel %vm1265, %v1264, 0.0
    %v1272 = vadd.f32 %v1270, %v1271
    %v1273 = vrot.slane %v1272, 4
    %v1274 = vadd.f32 %v1272, %v1273
    %v1275 = vrot.slane %v1274, 2
    %v1276 = vadd.f32 %v1274, %v1275
    %v1277 = vrot.slane %v1276, 1
    %v1278 = vadd.f32 %v1276, %v1277
    %v1279 = vld [vmem:[#allocation2] sm:$0x1]
    %1281 = vset.pattern.permute.xlu0 0
    %1282 = vperm.xlu0 %1281, %v1279
    %v1283 = vpop.permute.xlu0 %1282
    %v1285 = vlaneseq
    %v1286 = vshrl.u32 %v1285, 7
    %v1287 = vsub.s32 0, %v1286
    %v1288 = vrot.slane %v1283, %v1287
    %v1289 = vadd.f32 %v1278, %v1288
    %vm1290 = vcmask 24576
    %1291 = vst.msk [vmem:[#allocation3] sm:$0x1] %vm1290, %v1289
    // Predicated region
    $region46: #{discriminator_forward.1} parent=1 // pred_check
      _
    $region47: #{discriminator_forward.1} parent=1 // pred_check_branch
      %1293 = sbr.rel (0) target = $region49
    $region48: #{discriminator_forward.1} parent=1 // pred_region
      %s1295 = ssub.s32 16, 16
      %1296 = vsyncadd [#allocation4], %s1295
      %s1298 = sshll.u32 [#allocation3], 4
      %s1299 = int_to_ptr.vmem [resolvable:$true] %s1298
      %1301 = dma.vmem_to_hbm [thread:$0]  %s1299, 16, %s11, [#allocation4]
    $region49: #{discriminator_forward.1} parent=1 // pred_fallthru
      _
    // Predicated region
    $region50: #{discriminator_forward.1} parent=1 // pred_check
      _
    $region51: #{discriminator_forward.1} parent=1 // pred_check_branch
      %1303 = sbr.rel (0) target = $region53
    $region52: #{discriminator_forward.1} parent=1 // pred_region
      %1304 = dma.done [#allocation4], 16
    $region53: #{discriminator_forward.1} parent=1 // pred_fallthru
      _
    %1305 = vsyncpa [#allocation4], 1

</llo_original>
